<compile_context>
chip_gen: v5e
topology: v5e:2x2
jax: 0.10.0
libtpu: 0.0.40
codegen_flags: <defaults>
</compile_context>

<pallas_src>
import functools

import jax
import jax.numpy as jnp
from jax.experimental import pallas as pl
from jax.experimental.pallas import tpu as pltpu

NEG_BIG = -1e30          # Python float: used only at param-prep time (no kernel const)
NUM_CLASSES = 10
PAD_N = 128              # lane-dense padded width for fc3/fc4 outputs


def _round_up(x, m):
    return ((x + m - 1) // m) * m


def mlp_kernel(x_ref, w1_ref, b1_ref, w2_ref, b2_ref, w3_ref, b3_ref,
               w4_ref, b4_ref, o_ref):
    # x arrives as f32 (half the HBM traffic vs. a wrapper-side bf16 cast
    # pass); cast to bf16 on the VPU right before the MXU dot. All
    # accumulation / bias / ReLU / softmax math stays in f32.
    x = x_ref[...].astype(jnp.bfloat16)                       # (tile_b, 784)

    # fc1 + relu
    h = jnp.dot(x, w1_ref[...], preferred_element_type=jnp.float32) + b1_ref[...]
    h = jnp.maximum(h, 0.0)

    # fc2 + relu
    h = jnp.dot(h.astype(jnp.bfloat16), w2_ref[...],
                preferred_element_type=jnp.float32) + b2_ref[...]
    h = jnp.maximum(h, 0.0)

    # fc3 + relu (output lane-padded 64 -> 128; pad cols are zero)
    h = jnp.dot(h.astype(jnp.bfloat16), w3_ref[...],
                preferred_element_type=jnp.float32) + b3_ref[...]
    h = jnp.maximum(h, 0.0)

    # fc4 (output lane-padded 10 -> 128). Padded logit columns get bias
    # -1e30 (set in prepare_params), so they never win the row max and
    # exp() underflows to 0 -- no in-kernel masking needed.
    logits = jnp.dot(h.astype(jnp.bfloat16), w4_ref[...],
                     preferred_element_type=jnp.float32) + b4_ref[...]

    m = jnp.max(logits, axis=-1, keepdims=True)
    shifted = logits - m
    lse = jnp.log(jnp.sum(jnp.exp(shifted), axis=-1, keepdims=True))
    o_ref[...] = (shifted - lse).astype(o_ref.dtype)


def prepare_params(params):
    """One-time weight prep (pad + bf16 cast) hoisted out of the forward."""
    (w1, b1), (w2, b2), (w3, b3), (w4, b4) = params
    w1 = w1.astype(jnp.bfloat16)
    w2 = w2.astype(jnp.bfloat16)
    b1 = b1.astype(jnp.float32)
    b2 = b2.astype(jnp.float32)
    # fc3: (128, 64) -> (128, 128) zero-padded columns; b3 -> (1, 128) zeros.
    w3p = jnp.pad(w3, ((0, 0), (0, PAD_N - w3.shape[1]))).astype(jnp.bfloat16)
    b3p = jnp.pad(b3, ((0, 0), (0, PAD_N - b3.shape[1]))).astype(jnp.float32)
    # fc4: (64, 10) -> (128, 128). Zero-padded rows match the zero-padded h3
    # columns; padded bias columns are set to -1e30 so the padded logits are
    # hugely negative and drop out of the softmax without in-kernel masking.
    w4p = jnp.pad(w4, ((0, PAD_N - w4.shape[0]), (0, PAD_N - w4.shape[1]))
                  ).astype(jnp.bfloat16)
    b4p = jnp.pad(b4.astype(jnp.float32),
                  ((0, 0), (0, PAD_N - b4.shape[1])),
                  constant_values=NEG_BIG)
    return (w1, b1, w2, b2, w3p, b3p, w4p, b4p)


@functools.partial(jax.jit, static_argnames=("tile_b",))
def classifier_forward(x, prep, *, tile_b=1024):
    """x: (B, 1, 28, 28) float32 NCHW. prep: prepare_params(...) output.
    Returns (B, 10) log-probabilities (f32)."""
    B = x.shape[0]
    x_flat = x.reshape(B, -1)          # f32; bf16 cast happens inside the kernel

    # Batch tile: multiple of 8 sublanes. Aim for >= 2 grid steps when B
    # allows (v7x megacore shards the "parallel" axis across both TCs), then
    # rebalance so the last tile isn't nearly dead.
    tile = min(tile_b, _round_up(B, 8))
    if B > 8:
        tile = min(tile, _round_up(pl.cdiv(B, 2), 8))
    num_tiles = pl.cdiv(B, tile)
    tile = _round_up(pl.cdiv(B, num_tiles), 8)
    b_pad = num_tiles * tile
    if b_pad != B:
        x_flat = jnp.pad(x_flat, ((0, b_pad - B), (0, 0)))

    w1, b1, w2, b2, w3p, b3p, w4p, b4p = prep
    const = lambda i: (0, 0)   # weights/biases resident across all grid steps

    out_padded = pl.pallas_call(
        mlp_kernel,
        out_shape=jax.ShapeDtypeStruct((b_pad, PAD_N), jnp.bfloat16),
        grid_spec=pltpu.PrefetchScalarGridSpec(
            num_scalar_prefetch=0,
            grid=(num_tiles,),
            in_specs=[
                pl.BlockSpec((tile, 784), lambda i: (i, 0)),     # x tile (f32)
                pl.BlockSpec((784, 256), const),                 # w1
                pl.BlockSpec((1, 256), const),                   # b1
                pl.BlockSpec((256, 128), const),                 # w2
                pl.BlockSpec((1, 128), const),                   # b2
                pl.BlockSpec((128, PAD_N), const),               # w3 (padded)
                pl.BlockSpec((1, PAD_N), const),                 # b3 (padded)
                pl.BlockSpec((PAD_N, PAD_N), const),             # w4 (padded)
                pl.BlockSpec((1, PAD_N), const),                 # b4 (padded, -1e30 cols)
            ],
            out_specs=pl.BlockSpec((tile, PAD_N), lambda i: (i, 0)),
        ),
        compiler_params=pltpu.CompilerParams(
            dimension_semantics=("parallel",),
            vmem_limit_bytes=32 * 1024 * 1024,
        ),
    )(x_flat, w1, b1, w2, b2, w3p, b3p, w4p, b4p)

    return out_padded[:B, :NUM_CLASSES].astype(jnp.float32)


def classifier_forward_ref(x, params):
    """Pure-JAX f32 reference for correctness checking."""
    B = x.shape[0]
    h = x.reshape(B, -1)
    (w1, b1), (w2, b2), (w3, b3), (w4, b4) = params
    h = jnp.maximum(h @ w1 + b1, 0.0)
    h = jnp.maximum(h @ w2 + b2, 0.0)
    h = jnp.maximum(h @ w3 + b3, 0.0)
    logits = h @ w4 + b4
    return jax.nn.log_softmax(logits, axis=-1)


def init_params(key):
    """Deterministic init mirroring nn.Linear's uniform(-1/sqrt(in), 1/sqrt(in))."""
    dims = [(784, 256), (256, 128), (128, 64), (64, 10)]
    params = []
    for (fan_in, fan_out) in dims:
        key, kw, kb = jax.random.split(key, 3)
        bound = 1.0 / jnp.sqrt(fan_in)
        w = jax.random.uniform(kw, (fan_in, fan_out), jnp.float32, -bound, bound)
        b = jax.random.uniform(kb, (1, fan_out), jnp.float32, -bound, bound)
        params.append((w, b))
    return params


if __name__ == "__main__":
    key = jax.random.PRNGKey(0)
    key, kx = jax.random.split(key)
    params = init_params(key)
    prep = prepare_params(params)

    B = 8
    x = jax.random.normal(kx, (B, 1, 28, 28), jnp.float32)

    out = classifier_forward(x, prep)
    out = jax.block_until_ready(out)

    # sanity: shape, finiteness, log-probs exp-sum to ~1 per row
    # (bf16 output storage -> ~3 significant digits, hence the loose atol)
    assert out.shape == (B, 10)
    assert bool(jnp.all(jnp.isfinite(out)))
    probs_sum = jnp.sum(jnp.exp(out), axis=-1)
    assert bool(jnp.allclose(probs_sum, 1.0, atol=5e-2))

    # correctness vs pure-JAX f32 reference (loose tol: bf16 matmul inputs
    # and bf16 log-prob storage)
    ref = classifier_forward_ref(x, params)
    assert bool(jnp.allclose(out, ref, atol=0.2)), \
        f"max abs err {float(jnp.max(jnp.abs(out - ref)))}"

    print("KERNEL_OK")
</pallas_src>

<mosaic_0001>
module attributes {stable_mosaic.version = 11 : i64} {
  func.func @mlp_kernel(%arg0: i32, %arg1: memref<8x784xf32, #tpu.memory_space<vmem>>, %arg2: memref<784x256xbf16, #tpu.memory_space<vmem>>, %arg3: memref<1x256xf32, #tpu.memory_space<vmem>>, %arg4: memref<256x128xbf16, #tpu.memory_space<vmem>>, %arg5: memref<1x128xf32, #tpu.memory_space<vmem>>, %arg6: memref<128x128xbf16, #tpu.memory_space<vmem>>, %arg7: memref<1x128xf32, #tpu.memory_space<vmem>>, %arg8: memref<128x128xbf16, #tpu.memory_space<vmem>>, %arg9: memref<1x128xf32, #tpu.memory_space<vmem>>, %arg10: memref<8x128xbf16, #tpu.memory_space<vmem>>) attributes {dimension_semantics = [#tpu.dimension_semantics<parallel>], iteration_bounds = array<i64: 1>, scalar_prefetch = 0 : i64, scratch_operands = 0 : i64, tpu.core_type = #tpu.core_type<tc>, window_params = [{transform_indices = @transform_0, window_bounds = array<i64: 8, 784>}, {pipeline_mode = #tpu.pipeline_mode<synchronous>, transform_indices = @transform_1, window_bounds = array<i64: 784, 256>}, {pipeline_mode = #tpu.pipeline_mode<synchronous>, transform_indices = @transform_2, window_bounds = array<i64: 1, 256>}, {pipeline_mode = #tpu.pipeline_mode<synchronous>, transform_indices = @transform_3, window_bounds = array<i64: 256, 128>}, {pipeline_mode = #tpu.pipeline_mode<synchronous>, transform_indices = @transform_4, window_bounds = array<i64: 1, 128>}, {pipeline_mode = #tpu.pipeline_mode<synchronous>, transform_indices = @transform_5, window_bounds = array<i64: 128, 128>}, {pipeline_mode = #tpu.pipeline_mode<synchronous>, transform_indices = @transform_6, window_bounds = array<i64: 1, 128>}, {pipeline_mode = #tpu.pipeline_mode<synchronous>, transform_indices = @transform_7, window_bounds = array<i64: 128, 128>}, {pipeline_mode = #tpu.pipeline_mode<synchronous>, transform_indices = @transform_8, window_bounds = array<i64: 1, 128>}, {transform_indices = @transform_9, window_bounds = array<i64: 8, 128>}]} {
    %c0 = arith.constant 0 : index
    %c0_0 = arith.constant 0 : index
    %0 = vector.load %arg1[%c0, %c0_0] : memref<8x784xf32, #tpu.memory_space<vmem>>, vector<8x784xf32>
    %1 = arith.truncf %0 : vector<8x784xf32> to vector<8x784xbf16>
    %c0_1 = arith.constant 0 : index
    %c0_2 = arith.constant 0 : index
    %2 = vector.load %arg2[%c0_1, %c0_2] : memref<784x256xbf16, #tpu.memory_space<vmem>>, vector<784x256xbf16>
    %cst = arith.constant dense<0.000000e+00> : vector<8x256xf32>
    %3 = tpu.matmul %1, %2, %cst {dimension_numbers = #tpu.dot_dimension_numbers<[1], [0], [0], [1], [0, 0, 1, 1], [], []>} : vector<8x784xbf16>, vector<784x256xbf16>, vector<8x256xf32> -> vector<8x256xf32>
    %c0_3 = arith.constant 0 : index
    %c0_4 = arith.constant 0 : index
    %4 = vector.load %arg3[%c0_3, %c0_4] : memref<1x256xf32, #tpu.memory_space<vmem>>, vector<1x256xf32>
    %5 = vector.broadcast %4 : vector<1x256xf32> to vector<8x256xf32>
    %6 = arith.addf %3, %5 : vector<8x256xf32>
    %cst_5 = arith.constant 0.000000e+00 : f32
    %7 = vector.broadcast %cst_5 : f32 to vector<8x256xf32>
    %8 = arith.maximumf %6, %7 : vector<8x256xf32>
    %9 = arith.truncf %8 : vector<8x256xf32> to vector<8x256xbf16>
    %c0_6 = arith.constant 0 : index
    %c0_7 = arith.constant 0 : index
    %10 = vector.load %arg4[%c0_6, %c0_7] : memref<256x128xbf16, #tpu.memory_space<vmem>>, vector<256x128xbf16>
    %cst_8 = arith.constant dense<0.000000e+00> : vector<8x128xf32>
    %11 = tpu.matmul %9, %10, %cst_8 {dimension_numbers = #tpu.dot_dimension_numbers<[1], [0], [0], [1], [0, 0, 1, 1], [], []>} : vector<8x256xbf16>, vector<256x128xbf16>, vector<8x128xf32> -> vector<8x128xf32>
    %c0_9 = arith.constant 0 : index
    %c0_10 = arith.constant 0 : index
    %12 = vector.load %arg5[%c0_9, %c0_10] : memref<1x128xf32, #tpu.memory_space<vmem>>, vector<1x128xf32>
    %13 = vector.broadcast %12 : vector<1x128xf32> to vector<8x128xf32>
    %14 = arith.addf %11, %13 : vector<8x128xf32>
    %cst_11 = arith.constant 0.000000e+00 : f32
    %15 = vector.broadcast %cst_11 : f32 to vector<8x128xf32>
    %16 = arith.maximumf %14, %15 : vector<8x128xf32>
    %17 = arith.truncf %16 : vector<8x128xf32> to vector<8x128xbf16>
    %c0_12 = arith.constant 0 : index
    %c0_13 = arith.constant 0 : index
    %18 = vector.load %arg6[%c0_12, %c0_13] : memref<128x128xbf16, #tpu.memory_space<vmem>>, vector<128x128xbf16>
    %cst_14 = arith.constant dense<0.000000e+00> : vector<8x128xf32>
    %19 = tpu.matmul %17, %18, %cst_14 {dimension_numbers = #tpu.dot_dimension_numbers<[1], [0], [0], [1], [0, 0, 1, 1], [], []>} : vector<8x128xbf16>, vector<128x128xbf16>, vector<8x128xf32> -> vector<8x128xf32>
    %c0_15 = arith.constant 0 : index
    %c0_16 = arith.constant 0 : index
    %20 = vector.load %arg7[%c0_15, %c0_16] : memref<1x128xf32, #tpu.memory_space<vmem>>, vector<1x128xf32>
    %21 = vector.broadcast %20 : vector<1x128xf32> to vector<8x128xf32>
    %22 = arith.addf %19, %21 : vector<8x128xf32>
    %cst_17 = arith.constant 0.000000e+00 : f32
    %23 = vector.broadcast %cst_17 : f32 to vector<8x128xf32>
    %24 = arith.maximumf %22, %23 : vector<8x128xf32>
    %25 = arith.truncf %24 : vector<8x128xf32> to vector<8x128xbf16>
    %c0_18 = arith.constant 0 : index
    %c0_19 = arith.constant 0 : index
    %26 = vector.load %arg8[%c0_18, %c0_19] : memref<128x128xbf16, #tpu.memory_space<vmem>>, vector<128x128xbf16>
    %cst_20 = arith.constant dense<0.000000e+00> : vector<8x128xf32>
    %27 = tpu.matmul %25, %26, %cst_20 {dimension_numbers = #tpu.dot_dimension_numbers<[1], [0], [0], [1], [0, 0, 1, 1], [], []>} : vector<8x128xbf16>, vector<128x128xbf16>, vector<8x128xf32> -> vector<8x128xf32>
    %c0_21 = arith.constant 0 : index
    %c0_22 = arith.constant 0 : index
    %28 = vector.load %arg9[%c0_21, %c0_22] : memref<1x128xf32, #tpu.memory_space<vmem>>, vector<1x128xf32>
    %29 = vector.broadcast %28 : vector<1x128xf32> to vector<8x128xf32>
    %30 = arith.addf %27, %29 : vector<8x128xf32>
    %cst_23 = arith.constant dense<0xFF800000> : vector<8xf32>
    %31 = vector.multi_reduction <maximumf>, %30, %cst_23 [1] : vector<8x128xf32> to vector<8xf32>
    %32 = vector.shape_cast %31 : vector<8xf32> to vector<8x1xf32>
    %33 = vector.broadcast %32 : vector<8x1xf32> to vector<8x128xf32>
    %34 = arith.subf %30, %33 : vector<8x128xf32>
    %35 = math.exp %34 : vector<8x128xf32>
    %cst_24 = arith.constant dense<0.000000e+00> : vector<8xf32>
    %36 = vector.multi_reduction <add>, %35, %cst_24 [1] : vector<8x128xf32> to vector<8xf32>
    %37 = vector.shape_cast %36 : vector<8xf32> to vector<8x1xf32>
    %38 = math.log %37 : vector<8x1xf32>
    %39 = vector.broadcast %38 : vector<8x1xf32> to vector<8x128xf32>
    %40 = arith.subf %34, %39 : vector<8x128xf32>
    %41 = arith.truncf %40 : vector<8x128xf32> to vector<8x128xbf16>
    %c0_25 = arith.constant 0 : index
    %c0_26 = arith.constant 0 : index
    %42 = vector.load %arg10[%c0_25, %c0_26] : memref<8x128xbf16, #tpu.memory_space<vmem>>, vector<8x128xbf16>
    tpu.vector_store %arg10[%c0_25, %c0_26], %41 {strides = array<i32>} : memref<8x128xbf16, #tpu.memory_space<vmem>>, vector<8x128xbf16>,
    return
  }
  func.func @transform_0(%arg0: i32) -> (i32, i32) {
    %c0_i32 = arith.constant 0 : i32
    %c0_i32_0 = arith.constant 0 : i32
    return %arg0, %c0_i32 : i32, i32
  }
  func.func @transform_1(%arg0: i32) -> (i32, i32) {
    %c0_i32 = arith.constant 0 : i32
    %c0_i32_0 = arith.constant 0 : i32
    %c0_i32_1 = arith.constant 0 : i32
    return %c0_i32, %c0_i32_0 : i32, i32
  }
  func.func @transform_2(%arg0: i32) -> (i32, i32) {
    %c0_i32 = arith.constant 0 : i32
    %c0_i32_0 = arith.constant 0 : i32
    %c0_i32_1 = arith.constant 0 : i32
    return %c0_i32, %c0_i32_0 : i32, i32
  }
  func.func @transform_3(%arg0: i32) -> (i32, i32) {
    %c0_i32 = arith.constant 0 : i32
    %c0_i32_0 = arith.constant 0 : i32
    %c0_i32_1 = arith.constant 0 : i32
    return %c0_i32, %c0_i32_0 : i32, i32
  }
  func.func @transform_4(%arg0: i32) -> (i32, i32) {
    %c0_i32 = arith.constant 0 : i32
    %c0_i32_0 = arith.constant 0 : i32
    %c0_i32_1 = arith.constant 0 : i32
    return %c0_i32, %c0_i32_0 : i32, i32
  }
  func.func @transform_5(%arg0: i32) -> (i32, i32) {
    %c0_i32 = arith.constant 0 : i32
    %c0_i32_0 = arith.constant 0 : i32
    %c0_i32_1 = arith.constant 0 : i32
    return %c0_i32, %c0_i32_0 : i32, i32
  }
  func.func @transform_6(%arg0: i32) -> (i32, i32) {
    %c0_i32 = arith.constant 0 : i32
    %c0_i32_0 = arith.constant 0 : i32
    %c0_i32_1 = arith.constant 0 : i32
    return %c0_i32, %c0_i32_0 : i32, i32
  }
  func.func @transform_7(%arg0: i32) -> (i32, i32) {
    %c0_i32 = arith.constant 0 : i32
    %c0_i32_0 = arith.constant 0 : i32
    %c0_i32_1 = arith.constant 0 : i32
    return %c0_i32, %c0_i32_0 : i32, i32
  }
  func.func @transform_8(%arg0: i32) -> (i32, i32) {
    %c0_i32 = arith.constant 0 : i32
    %c0_i32_0 = arith.constant 0 : i32
    %c0_i32_1 = arith.constant 0 : i32
    return %c0_i32, %c0_i32_0 : i32, i32
  }
  func.func @transform_9(%arg0: i32) -> (i32, i32) {
    %c0_i32 = arith.constant 0 : i32
    %c0_i32_0 = arith.constant 0 : i32
    return %arg0, %c0_i32 : i32, i32
  }
}

</mosaic_0001>

<llo_original>
// kernel: classifier_forward.1
$region0: #{classifier_forward.1}
  #allocation0 [shape = 'u32[]', space=smem, size = 0x4, offset = 0x4, fixed_abs, tag = 'smem constant byte address 0x4 - core index']
  #allocation1 [shape = 'u32[72,128]{1,0:T(1,128)}', space=vmem, size = 0x9000, scoped, tag = 'internal scratch']
  %s0 = inlined_call_operand.vmem [shape: f32[8,784], index: 0, kind: input, shape index: {}]
  %s1 = inlined_call_operand.vmem [shape: bf16[784,256], index: 1, kind: input, shape index: {}]
  %s2 = inlined_call_operand.vmem [shape: f32[1,256], index: 2, kind: input, shape index: {}]
  %s3 = inlined_call_operand.hbm [shape: bf16[256,128], index: 3, kind: input, shape index: {}]
  %s4 = inlined_call_operand.vmem [shape: f32[1,128], index: 4, kind: input, shape index: {}]
  %s5 = inlined_call_operand.hbm [shape: bf16[128,128], index: 5, kind: input, shape index: {}]
  %s6 = inlined_call_operand.vmem [shape: f32[1,128], index: 6, kind: input, shape index: {}]
  %s7 = inlined_call_operand.hbm [shape: bf16[128,128], index: 7, kind: input, shape index: {}]
  %s8 = inlined_call_operand.vmem [shape: f32[1,128], index: 8, kind: input, shape index: {}]
  %s9 = inlined_call_operand.vmem [shape: bf16[8,128], index: 9, kind: output, shape index: {}]
  %s10 = sld [smem:[#allocation0]]
  $region58: #{classifier_forward.1} parent=0
    _
  %s12 = ssub.s32 1, %s10
  %s13 = scalar_select 0, %s12, %s10
  $region1: #{classifier_forward.1} parent=0
    #allocation2 [shape = 'u8[65536]{0}', space=vmem, size = 0x10000, scoped, tag = 'input window, operand 3, single buffered']
    #allocation3 [shape = 's32[1]{0}', space=sflag, size = 0x4, scoped, tag = 'scoped memory for classifier_forward.1']
    #allocation4 [shape = 'u8[32768]{0}', space=vmem, size = 0x8000, scoped, tag = 'input window, operand 5, single buffered']
    #allocation5 [shape = 's32[1]{0}', space=sflag, size = 0x4, scoped, tag = 'scoped memory for classifier_forward.1']
    #allocation6 [shape = 'u8[32768]{0}', space=vmem, size = 0x8000, scoped, tag = 'input window, operand 7, single buffered']
    %14 = vsyncpa [#allocation3], 0
    %15 = vsyncpa [#allocation5], 0
    // Predicated region
    $region2: #{classifier_forward.1} parent=1 // pred_check
      _
    $region3: #{classifier_forward.1} parent=1 // pred_check_branch
      %17 = sbr.rel (0) target = $region5
    $region4: #{classifier_forward.1} parent=1 // pred_region
      _
    $region5: #{classifier_forward.1} parent=1 // pred_fallthru
      _
    // Predicated region
    $region6: #{classifier_forward.1} parent=1 // pred_check
      _
    $region7: #{classifier_forward.1} parent=1 // pred_check_branch
      %19 = sbr.rel (0) target = $region9
    $region8: #{classifier_forward.1} parent=1 // pred_region
      _
    $region9: #{classifier_forward.1} parent=1 // pred_fallthru
      _
    // Predicated region
    $region10: #{classifier_forward.1} parent=1 // pred_check
      _
    $region11: #{classifier_forward.1} parent=1 // pred_check_branch
      %21 = sbr.rel (0) target = $region13
    $region12: #{classifier_forward.1} parent=1 // pred_region
      _
    $region13: #{classifier_forward.1} parent=1 // pred_fallthru
      _
    // Predicated region
    $region14: #{classifier_forward.1} parent=1 // pred_check
      _
    $region15: #{classifier_forward.1} parent=1 // pred_check_branch
      %23 = sbr.rel (0) target = $region17
    $region16: #{classifier_forward.1} parent=1 // pred_region
      %25 = vsyncadd [#allocation3], 0
      %s26 = sshll.u32 %s3, 4
      %s27 = int_to_ptr.hbm [resolvable:$true] %s26
      %s28 = sshll.u32 [#allocation2], 4
      %s29 = int_to_ptr.vmem [resolvable:$true] %s28
      %34 = dma.hbm_to_vmem [thread:$0]  %s27, 2048, %s29, [#allocation3], 64, 64, 4
    $region17: #{classifier_forward.1} parent=1 // pred_fallthru
      _
    // Predicated region
    $region18: #{classifier_forward.1} parent=1 // pred_check
      _
    $region19: #{classifier_forward.1} parent=1 // pred_check_branch
      %36 = sbr.rel (0) target = $region21
    $region20: #{classifier_forward.1} parent=1 // pred_region
      _
    $region21: #{classifier_forward.1} parent=1 // pred_fallthru
      _
    // Predicated region
    $region22: #{classifier_forward.1} parent=1 // pred_check
      _
    $region23: #{classifier_forward.1} parent=1 // pred_check_branch
      %38 = sbr.rel (0) target = $region25
    $region24: #{classifier_forward.1} parent=1 // pred_region
      %40 = vsyncadd [#allocation5], 0
      %s41 = sshll.u32 %s5, 4
      %s42 = int_to_ptr.hbm [resolvable:$true] %s41
      %s43 = sshll.u32 [#allocation4], 4
      %s44 = int_to_ptr.vmem [resolvable:$true] %s43
      %49 = dma.hbm_to_vmem [thread:$0]  %s42, 1024, %s44, [#allocation5], 64, 64, 4
    $region25: #{classifier_forward.1} parent=1 // pred_fallthru
      _
    // Predicated region
    $region26: #{classifier_forward.1} parent=1 // pred_check
      _
    $region27: #{classifier_forward.1} parent=1 // pred_check_branch
      %51 = sbr.rel (0) target = $region29
    $region28: #{classifier_forward.1} parent=1 // pred_region
      _
    $region29: #{classifier_forward.1} parent=1 // pred_fallthru
      _
    // Predicated region
    $region30: #{classifier_forward.1} parent=1 // pred_check
      _
    $region31: #{classifier_forward.1} parent=1 // pred_check_branch
      %53 = sbr.rel (0) target = $region33
    $region32: #{classifier_forward.1} parent=1 // pred_region
      %55 = vsyncadd [#allocation5], 0
      %s56 = sshll.u32 %s7, 4
      %s57 = int_to_ptr.hbm [resolvable:$true] %s56
      %s58 = sshll.u32 [#allocation6], 4
      %s59 = int_to_ptr.vmem [resolvable:$true] %s58
      %64 = dma.hbm_to_vmem [thread:$0]  %s57, 1024, %s59, [#allocation5], 64, 64, 4
    $region33: #{classifier_forward.1} parent=1 // pred_fallthru
      _
    // Predicated region
    $region34: #{classifier_forward.1} parent=1 // pred_check
      _
    $region35: #{classifier_forward.1} parent=1 // pred_check_branch
      %66 = sbr.rel (0) target = $region37
    $region36: #{classifier_forward.1} parent=1 // pred_region
      _
    $region37: #{classifier_forward.1} parent=1 // pred_fallthru
      _
    // Predicated region
    $region38: #{classifier_forward.1} parent=1 // pred_check
      _
    $region39: #{classifier_forward.1} parent=1 // pred_check_branch
      %68 = sbr.rel (0) target = $region41
    $region40: #{classifier_forward.1} parent=1 // pred_region
      %70 = dma.done [#allocation3], 2048
    $region41: #{classifier_forward.1} parent=1 // pred_fallthru
      _
    // Predicated region
    $region42: #{classifier_forward.1} parent=1 // pred_check
      _
    $region43: #{classifier_forward.1} parent=1 // pred_check_branch
      %72 = sbr.rel (0) target = $region45
    $region44: #{classifier_forward.1} parent=1 // pred_region
      %74 = dma.done [#allocation5], 1024
    $region45: #{classifier_forward.1} parent=1 // pred_fallthru
      _
    // Predicated region
    $region46: #{classifier_forward.1} parent=1 // pred_check
      _
    $region47: #{classifier_forward.1} parent=1 // pred_check_branch
      %76 = sbr.rel (0) target = $region49
    $region48: #{classifier_forward.1} parent=1 // pred_region
      %78 = dma.done [#allocation5], 1024
    $region49: #{classifier_forward.1} parent=1 // pred_fallthru
      _
    %v80 = vld [vmem:[%s0] sm:$0xff]
    %v81 = vld [vmem:[%s0 + $0x8] sm:$0xff]
    %v82 = vld [vmem:[%s0 + $0x10] sm:$0xff]
    %v83 = vld [vmem:[%s0 + $0x18] sm:$0xff]
    %v84 = vld [vmem:[%s0 + $0x20] sm:$0xff]
    %v85 = vld [vmem:[%s0 + $0x28] sm:$0xff]
    %v86 = vld [vmem:[%s0 + $0x30] sm:$0xff]
    %v87 = vpack.c.bf16 %v80, %v80
    %v88 = vpack.c.bf16 %v81, %v81
    %v89 = vpack.c.bf16 %v82, %v82
    %v90 = vpack.c.bf16 %v83, %v83
    %v91 = vpack.c.bf16 %v84, %v84
    %v92 = vpack.c.bf16 %v85, %v85
    %v93 = vpack.c.bf16 %v86, %v86
    %v94 = vld [vmem:[%s1] sm:$0xff]
    %v95 = vld [vmem:[%s1 + $0x8] sm:$0xff]
    %v96 = vld [vmem:[%s1 + $0x10] sm:$0xff]
    %v97 = vld [vmem:[%s1 + $0x18] sm:$0xff]
    %v98 = vld [vmem:[%s1 + $0x20] sm:$0xff]
    %v99 = vld [vmem:[%s1 + $0x28] sm:$0xff]
    %v100 = vld [vmem:[%s1 + $0x30] sm:$0xff]
    %v101 = vld [vmem:[%s1 + $0x38] sm:$0xff]
    %v102 = vld [vmem:[%s1 + $0x40] sm:$0xff]
    %v103 = vld [vmem:[%s1 + $0x48] sm:$0xff]
    %v104 = vld [vmem:[%s1 + $0x50] sm:$0xff]
    %v105 = vld [vmem:[%s1 + $0x58] sm:$0xff]
    %v106 = vld [vmem:[%s1 + $0x60] sm:$0xff]
    %v107 = vld [vmem:[%s1 + $0x68] sm:$0xff]
    %v108 = vld [vmem:[%s1 + $0x70] sm:$0xff]
    %v109 = vld [vmem:[%s1 + $0x78] sm:$0xff]
    %v110 = vld [vmem:[%s1 + $0x80] sm:$0xff]
    %v111 = vld [vmem:[%s1 + $0x88] sm:$0xff]
    %v112 = vld [vmem:[%s1 + $0x90] sm:$0xff]
    %v113 = vld [vmem:[%s1 + $0x98] sm:$0xff]
    %v114 = vld [vmem:[%s1 + $0xa0] sm:$0xff]
    %v115 = vld [vmem:[%s1 + $0xa8] sm:$0xff]
    %v116 = vld [vmem:[%s1 + $0xb0] sm:$0xff]
    %v117 = vld [vmem:[%s1 + $0xb8] sm:$0xff]
    %v118 = vld [vmem:[%s1 + $0xc0] sm:$0xff]
    %v119 = vld [vmem:[%s1 + $0xc8] sm:$0xff]
    %v120 = vld [vmem:[%s1 + $0xd0] sm:$0xff]
    %v121 = vld [vmem:[%s1 + $0xd8] sm:$0xff]
    %v122 = vld [vmem:[%s1 + $0xe0] sm:$0xff]
    %v123 = vld [vmem:[%s1 + $0xe8] sm:$0xff]
    %v124 = vld [vmem:[%s1 + $0xf0] sm:$0xff]
    %v125 = vld [vmem:[%s1 + $0xf8] sm:$0xff]
    %v126 = vld [vmem:[%s1 + $0x100] sm:$0xff]
    %v127 = vld [vmem:[%s1 + $0x108] sm:$0xff]
    %v128 = vld [vmem:[%s1 + $0x110] sm:$0xff]
    %v129 = vld [vmem:[%s1 + $0x118] sm:$0xff]
    %v130 = vld [vmem:[%s1 + $0x120] sm:$0xff]
    %v131 = vld [vmem:[%s1 + $0x128] sm:$0xff]
    %v132 = vld [vmem:[%s1 + $0x130] sm:$0xff]
    %v133 = vld [vmem:[%s1 + $0x138] sm:$0xff]
    %v134 = vld [vmem:[%s1 + $0x140] sm:$0xff]
    %v135 = vld [vmem:[%s1 + $0x148] sm:$0xff]
    %v136 = vld [vmem:[%s1 + $0x150] sm:$0xff]
    %v137 = vld [vmem:[%s1 + $0x158] sm:$0xff]
    %v138 = vld [vmem:[%s1 + $0x160] sm:$0xff]
    %v139 = vld [vmem:[%s1 + $0x168] sm:$0xff]
    %v140 = vld [vmem:[%s1 + $0x170] sm:$0xff]
    %v141 = vld [vmem:[%s1 + $0x178] sm:$0xff]
    %v142 = vld [vmem:[%s1 + $0x180] sm:$0xff]
    %v143 = vld [vmem:[%s1 + $0x188] sm:$0xff]
    %v144 = vld [vmem:[%s1 + $0x190] sm:$0xff]
    %v145 = vld [vmem:[%s1 + $0x198] sm:$0xff]
    %v146 = vld [vmem:[%s1 + $0x1a0] sm:$0xff]
    %v147 = vld [vmem:[%s1 + $0x1a8] sm:$0xff]
    %v148 = vld [vmem:[%s1 + $0x1b0] sm:$0xff]
    %v149 = vld [vmem:[%s1 + $0x1b8] sm:$0xff]
    %v150 = vld [vmem:[%s1 + $0x1c0] sm:$0xff]
    %v151 = vld [vmem:[%s1 + $0x1c8] sm:$0xff]
    %v152 = vld [vmem:[%s1 + $0x1d0] sm:$0xff]
    %v153 = vld [vmem:[%s1 + $0x1d8] sm:$0xff]
    %v154 = vld [vmem:[%s1 + $0x1e0] sm:$0xff]
    %v155 = vld [vmem:[%s1 + $0x1e8] sm:$0xff]
    %v156 = vld [vmem:[%s1 + $0x1f0] sm:$0xff]
    %v157 = vld [vmem:[%s1 + $0x1f8] sm:$0xff]
    %v158 = vld [vmem:[%s1 + $0x200] sm:$0xff]
    %v159 = vld [vmem:[%s1 + $0x208] sm:$0xff]
    %v160 = vld [vmem:[%s1 + $0x210] sm:$0xff]
    %v161 = vld [vmem:[%s1 + $0x218] sm:$0xff]
    %v162 = vld [vmem:[%s1 + $0x220] sm:$0xff]
    %v163 = vld [vmem:[%s1 + $0x228] sm:$0xff]
    %v164 = vld [vmem:[%s1 + $0x230] sm:$0xff]
    %v165 = vld [vmem:[%s1 + $0x238] sm:$0xff]
    %v166 = vld [vmem:[%s1 + $0x240] sm:$0xff]
    %v167 = vld [vmem:[%s1 + $0x248] sm:$0xff]
    %v168 = vld [vmem:[%s1 + $0x250] sm:$0xff]
    %v169 = vld [vmem:[%s1 + $0x258] sm:$0xff]
    %v170 = vld [vmem:[%s1 + $0x260] sm:$0xff]
    %v171 = vld [vmem:[%s1 + $0x268] sm:$0xff]
    %v172 = vld [vmem:[%s1 + $0x270] sm:$0xff]
    %v173 = vld [vmem:[%s1 + $0x278] sm:$0xff]
    %v174 = vld [vmem:[%s1 + $0x280] sm:$0xff]
    %v175 = vld [vmem:[%s1 + $0x288] sm:$0xff]
    %v176 = vld [vmem:[%s1 + $0x290] sm:$0xff]
    %v177 = vld [vmem:[%s1 + $0x298] sm:$0xff]
    %v178 = vld [vmem:[%s1 + $0x2a0] sm:$0xff]
    %v179 = vld [vmem:[%s1 + $0x2a8] sm:$0xff]
    %v180 = vld [vmem:[%s1 + $0x2b0] sm:$0xff]
    %v181 = vld [vmem:[%s1 + $0x2b8] sm:$0xff]
    %v182 = vld [vmem:[%s1 + $0x2c0] sm:$0xff]
    %v183 = vld [vmem:[%s1 + $0x2c8] sm:$0xff]
    %v184 = vld [vmem:[%s1 + $0x2d0] sm:$0xff]
    %v185 = vld [vmem:[%s1 + $0x2d8] sm:$0xff]
    %v186 = vld [vmem:[%s1 + $0x2e0] sm:$0xff]
    %v187 = vld [vmem:[%s1 + $0x2e8] sm:$0xff]
    %v188 = vld [vmem:[%s1 + $0x2f0] sm:$0xff]
    %v189 = vld [vmem:[%s1 + $0x2f8] sm:$0xff]
    %v190 = vld [vmem:[%s1 + $0x300] sm:$0xff]
    %v191 = vld [vmem:[%s1 + $0x308] sm:$0xff]
    %v192 = vld [vmem:[%s2] sm:$0x3]
    %v194 = vperm.slane %v192, 0
    %v195 = vperm.slane %v192, 1
    %v296 = vunpack.c.l.b16 %v94
    %v297 = vunpack.c.h.b16 %v94
    %v298 = vunpack.c.l.b16 %v95
    %v299 = vunpack.c.h.b16 %v95
    %v300 = vunpack.c.l.b16 %v96
    %v301 = vunpack.c.h.b16 %v96
    %v302 = vunpack.c.l.b16 %v97
    %v303 = vunpack.c.h.b16 %v97
    %v304 = vunpack.c.l.b16 %v98
    %v305 = vunpack.c.h.b16 %v98
    %v306 = vunpack.c.l.b16 %v99
    %v307 = vunpack.c.h.b16 %v99
    %v308 = vunpack.c.l.b16 %v100
    %v309 = vunpack.c.h.b16 %v100
    %v310 = vunpack.c.l.b16 %v101
    %v311 = vunpack.c.h.b16 %v101
    %v312 = vunpack.c.l.b16 %v102
    %v313 = vunpack.c.h.b16 %v102
    %v314 = vunpack.c.l.b16 %v103
    %v315 = vunpack.c.h.b16 %v103
    %v316 = vunpack.c.l.b16 %v104
    %v317 = vunpack.c.h.b16 %v104
    %v318 = vunpack.c.l.b16 %v105
    %v319 = vunpack.c.h.b16 %v105
    %v320 = vunpack.c.l.b16 %v106
    %v321 = vunpack.c.h.b16 %v106
    %v322 = vunpack.c.l.b16 %v107
    %v323 = vunpack.c.h.b16 %v107
    %v324 = vunpack.c.l.b16 %v108
    %v325 = vunpack.c.h.b16 %v108
    %v326 = vunpack.c.l.b16 %v109
    %v327 = vunpack.c.h.b16 %v109
    %v328 = vunpack.c.l.b16 %v110
    %v329 = vunpack.c.h.b16 %v110
    %v330 = vunpack.c.l.b16 %v111
    %v331 = vunpack.c.h.b16 %v111
    %v332 = vunpack.c.l.b16 %v112
    %v333 = vunpack.c.h.b16 %v112
    %v334 = vunpack.c.l.b16 %v113
    %v335 = vunpack.c.h.b16 %v113
    %v336 = vunpack.c.l.b16 %v114
    %v337 = vunpack.c.h.b16 %v114
    %v338 = vunpack.c.l.b16 %v115
    %v339 = vunpack.c.h.b16 %v115
    %v340 = vunpack.c.l.b16 %v116
    %v341 = vunpack.c.h.b16 %v116
    %v342 = vunpack.c.l.b16 %v117
    %v343 = vunpack.c.h.b16 %v117
    %v344 = vunpack.c.l.b16 %v118
    %v345 = vunpack.c.h.b16 %v118
    %v346 = vunpack.c.l.b16 %v119
    %v347 = vunpack.c.h.b16 %v119
    %v348 = vunpack.c.l.b16 %v120
    %v349 = vunpack.c.h.b16 %v120
    %v350 = vunpack.c.l.b16 %v121
    %v351 = vunpack.c.h.b16 %v121
    %v352 = vunpack.c.l.b16 %v122
    %v353 = vunpack.c.h.b16 %v122
    %v354 = vunpack.c.l.b16 %v123
    %v355 = vunpack.c.h.b16 %v123
    %v356 = vunpack.c.l.b16 %v124
    %v357 = vunpack.c.h.b16 %v124
    %v358 = vunpack.c.l.b16 %v125
    %v359 = vunpack.c.h.b16 %v125
    %v360 = vunpack.c.l.b16 %v126
    %v361 = vunpack.c.h.b16 %v126
    %v362 = vunpack.c.l.b16 %v127
    %v363 = vunpack.c.h.b16 %v127
    %v364 = vunpack.c.l.b16 %v128
    %v365 = vunpack.c.h.b16 %v128
    %v366 = vunpack.c.l.b16 %v129
    %v367 = vunpack.c.h.b16 %v129
    %v368 = vunpack.c.l.b16 %v130
    %v369 = vunpack.c.h.b16 %v130
    %v370 = vunpack.c.l.b16 %v131
    %v371 = vunpack.c.h.b16 %v131
    %v372 = vunpack.c.l.b16 %v132
    %v373 = vunpack.c.h.b16 %v132
    %v374 = vunpack.c.l.b16 %v133
    %v375 = vunpack.c.h.b16 %v133
    %v376 = vunpack.c.l.b16 %v134
    %v377 = vunpack.c.h.b16 %v134
    %v378 = vunpack.c.l.b16 %v135
    %v379 = vunpack.c.h.b16 %v135
    %v380 = vunpack.c.l.b16 %v136
    %v381 = vunpack.c.h.b16 %v136
    %v382 = vunpack.c.l.b16 %v137
    %v383 = vunpack.c.h.b16 %v137
    %v384 = vunpack.c.l.b16 %v138
    %v385 = vunpack.c.h.b16 %v138
    %v386 = vunpack.c.l.b16 %v139
    %v387 = vunpack.c.h.b16 %v139
    %v388 = vunpack.c.l.b16 %v140
    %v389 = vunpack.c.h.b16 %v140
    %v390 = vunpack.c.l.b16 %v141
    %v391 = vunpack.c.h.b16 %v141
    %v392 = vunpack.c.l.b16 %v142
    %v393 = vunpack.c.h.b16 %v142
    %v394 = vunpack.c.l.b16 %v143
    %v395 = vunpack.c.h.b16 %v143
    %v396 = vunpack.c.l.b16 %v144
    %v397 = vunpack.c.h.b16 %v144
    %v398 = vunpack.c.l.b16 %v145
    %v399 = vunpack.c.h.b16 %v145
    %v400 = vunpack.c.l.b16 %v146
    %v401 = vunpack.c.h.b16 %v146
    %v402 = vunpack.c.l.b16 %v147
    %v403 = vunpack.c.h.b16 %v147
    %v404 = vunpack.c.l.b16 %v148
    %v405 = vunpack.c.h.b16 %v148
    %v406 = vunpack.c.l.b16 %v149
    %v407 = vunpack.c.h.b16 %v149
    %v408 = vunpack.c.l.b16 %v150
    %v409 = vunpack.c.h.b16 %v150
    %v410 = vunpack.c.l.b16 %v151
    %v411 = vunpack.c.h.b16 %v151
    %v412 = vunpack.c.l.b16 %v152
    %v413 = vunpack.c.h.b16 %v152
    %v414 = vunpack.c.l.b16 %v153
    %v415 = vunpack.c.h.b16 %v153
    %v416 = vunpack.c.l.b16 %v154
    %v417 = vunpack.c.h.b16 %v154
    %v418 = vunpack.c.l.b16 %v155
    %v419 = vunpack.c.h.b16 %v155
    %v420 = vunpack.c.l.b16 %v156
    %v421 = vunpack.c.h.b16 %v156
    %v422 = vunpack.c.l.b16 %v157
    %v423 = vunpack.c.h.b16 %v157
    %v424 = vunpack.c.l.b16 %v158
    %v425 = vunpack.c.h.b16 %v158
    %v426 = vunpack.c.l.b16 %v159
    %v427 = vunpack.c.h.b16 %v159
    %v428 = vunpack.c.l.b16 %v160
    %v429 = vunpack.c.h.b16 %v160
    %v430 = vunpack.c.l.b16 %v161
    %v431 = vunpack.c.h.b16 %v161
    %v432 = vunpack.c.l.b16 %v162
    %v433 = vunpack.c.h.b16 %v162
    %v434 = vunpack.c.l.b16 %v163
    %v435 = vunpack.c.h.b16 %v163
    %v436 = vunpack.c.l.b16 %v164
    %v437 = vunpack.c.h.b16 %v164
    %v438 = vunpack.c.l.b16 %v165
    %v439 = vunpack.c.h.b16 %v165
    %v440 = vunpack.c.l.b16 %v166
    %v441 = vunpack.c.h.b16 %v166
    %v442 = vunpack.c.l.b16 %v167
    %v443 = vunpack.c.h.b16 %v167
    %v444 = vunpack.c.l.b16 %v168
    %v445 = vunpack.c.h.b16 %v168
    %v446 = vunpack.c.l.b16 %v169
    %v447 = vunpack.c.h.b16 %v169
    %v448 = vunpack.c.l.b16 %v170
    %v449 = vunpack.c.h.b16 %v170
    %v450 = vunpack.c.l.b16 %v171
    %v451 = vunpack.c.h.b16 %v171
    %v452 = vunpack.c.l.b16 %v172
    %v453 = vunpack.c.h.b16 %v172
    %v454 = vunpack.c.l.b16 %v173
    %v455 = vunpack.c.h.b16 %v173
    %v456 = vunpack.c.l.b16 %v174
    %v457 = vunpack.c.h.b16 %v174
    %v458 = vunpack.c.l.b16 %v175
    %v459 = vunpack.c.h.b16 %v175
    %v460 = vunpack.c.l.b16 %v176
    %v461 = vunpack.c.h.b16 %v176
    %v462 = vunpack.c.l.b16 %v177
    %v463 = vunpack.c.h.b16 %v177
    %v464 = vunpack.c.l.b16 %v178
    %v465 = vunpack.c.h.b16 %v178
    %v466 = vunpack.c.l.b16 %v179
    %v467 = vunpack.c.h.b16 %v179
    %v468 = vunpack.c.l.b16 %v180
    %v469 = vunpack.c.h.b16 %v180
    %v470 = vunpack.c.l.b16 %v181
    %v471 = vunpack.c.h.b16 %v181
    %v472 = vunpack.c.l.b16 %v182
    %v473 = vunpack.c.h.b16 %v182
    %v474 = vunpack.c.l.b16 %v183
    %v475 = vunpack.c.h.b16 %v183
    %v476 = vunpack.c.l.b16 %v184
    %v477 = vunpack.c.h.b16 %v184
    %v478 = vunpack.c.l.b16 %v185
    %v479 = vunpack.c.h.b16 %v185
    %v480 = vunpack.c.l.b16 %v186
    %v481 = vunpack.c.h.b16 %v186
    %v482 = vunpack.c.l.b16 %v187
    %v483 = vunpack.c.h.b16 %v187
    %v484 = vunpack.c.l.b16 %v188
    %v485 = vunpack.c.h.b16 %v188
    %v486 = vunpack.c.l.b16 %v189
    %v487 = vunpack.c.h.b16 %v189
    %v488 = vunpack.c.l.b16 %v190
    %v489 = vunpack.c.h.b16 %v190
    %v490 = vunpack.c.l.b16 %v191
    %v491 = vunpack.c.h.b16 %v191
    %v492 = vpack.c.b16 %v298, %v296
    %v493 = vpack.c.b16 %v299, %v297
    %v494 = vpack.c.b16 %v302, %v300
    %v495 = vpack.c.b16 %v303, %v301
    %v496 = vpack.c.b16 %v306, %v304
    %v497 = vpack.c.b16 %v307, %v305
    %v498 = vpack.c.b16 %v310, %v308
    %v499 = vpack.c.b16 %v311, %v309
    %v500 = vpack.c.b16 %v314, %v312
    %v501 = vpack.c.b16 %v315, %v313
    %v502 = vpack.c.b16 %v318, %v316
    %v503 = vpack.c.b16 %v319, %v317
    %v504 = vpack.c.b16 %v322, %v320
    %v505 = vpack.c.b16 %v323, %v321
    %v506 = vpack.c.b16 %v326, %v324
    %v507 = vpack.c.b16 %v327, %v325
    %v508 = vpack.c.b16 %v330, %v328
    %v509 = vpack.c.b16 %v331, %v329
    %v510 = vpack.c.b16 %v334, %v332
    %v511 = vpack.c.b16 %v335, %v333
    %v512 = vpack.c.b16 %v338, %v336
    %v513 = vpack.c.b16 %v339, %v337
    %v514 = vpack.c.b16 %v342, %v340
    %v515 = vpack.c.b16 %v343, %v341
    %v516 = vpack.c.b16 %v346, %v344
    %v517 = vpack.c.b16 %v347, %v345
    %v518 = vpack.c.b16 %v350, %v348
    %v519 = vpack.c.b16 %v351, %v349
    %v520 = vpack.c.b16 %v354, %v352
    %v521 = vpack.c.b16 %v355, %v353
    %v522 = vpack.c.b16 %v358, %v356
    %v523 = vpack.c.b16 %v359, %v357
    %v524 = vpack.c.b16 %v362, %v360
    %v525 = vpack.c.b16 %v363, %v361
    %v526 = vpack.c.b16 %v366, %v364
    %v527 = vpack.c.b16 %v367, %v365
    %v528 = vpack.c.b16 %v370, %v368
    %v529 = vpack.c.b16 %v371, %v369
    %v530 = vpack.c.b16 %v374, %v372
    %v531 = vpack.c.b16 %v375, %v373
    %v532 = vpack.c.b16 %v378, %v376
    %v533 = vpack.c.b16 %v379, %v377
    %v534 = vpack.c.b16 %v382, %v380
    %v535 = vpack.c.b16 %v383, %v381
    %v536 = vpack.c.b16 %v386, %v384
    %v537 = vpack.c.b16 %v387, %v385
    %v538 = vpack.c.b16 %v390, %v388
    %v539 = vpack.c.b16 %v391, %v389
    %v540 = vpack.c.b16 %v394, %v392
    %v541 = vpack.c.b16 %v395, %v393
    %v542 = vpack.c.b16 %v398, %v396
    %v543 = vpack.c.b16 %v399, %v397
    %v544 = vpack.c.b16 %v402, %v400
    %v545 = vpack.c.b16 %v403, %v401
    %v546 = vpack.c.b16 %v406, %v404
    %v547 = vpack.c.b16 %v407, %v405
    %v548 = vpack.c.b16 %v410, %v408
    %v549 = vpack.c.b16 %v411, %v409
    %v550 = vpack.c.b16 %v414, %v412
    %v551 = vpack.c.b16 %v415, %v413
    %v552 = vpack.c.b16 %v418, %v416
    %v553 = vpack.c.b16 %v419, %v417
    %v554 = vpack.c.b16 %v422, %v420
    %v555 = vpack.c.b16 %v423, %v421
    %v556 = vpack.c.b16 %v426, %v424
    %v557 = vpack.c.b16 %v427, %v425
    %v558 = vpack.c.b16 %v430, %v428
    %v559 = vpack.c.b16 %v431, %v429
    %v560 = vpack.c.b16 %v434, %v432
    %v561 = vpack.c.b16 %v435, %v433
    %v562 = vpack.c.b16 %v438, %v436
    %v563 = vpack.c.b16 %v439, %v437
    %v564 = vpack.c.b16 %v442, %v440
    %v565 = vpack.c.b16 %v443, %v441
    %v566 = vpack.c.b16 %v446, %v444
    %v567 = vpack.c.b16 %v447, %v445
    %v568 = vpack.c.b16 %v450, %v448
    %v569 = vpack.c.b16 %v451, %v449
    %v570 = vpack.c.b16 %v454, %v452
    %v571 = vpack.c.b16 %v455, %v453
    %v572 = vpack.c.b16 %v458, %v456
    %v573 = vpack.c.b16 %v459, %v457
    %v574 = vpack.c.b16 %v462, %v460
    %v575 = vpack.c.b16 %v463, %v461
    %v576 = vpack.c.b16 %v466, %v464
    %v577 = vpack.c.b16 %v467, %v465
    %v578 = vpack.c.b16 %v470, %v468
    %v579 = vpack.c.b16 %v471, %v469
    %v580 = vpack.c.b16 %v474, %v472
    %v581 = vpack.c.b16 %v475, %v473
    %v582 = vpack.c.b16 %v478, %v476
    %v583 = vpack.c.b16 %v479, %v477
    %v584 = vpack.c.b16 %v482, %v480
    %v585 = vpack.c.b16 %v483, %v481
    %v586 = vpack.c.b16 %v486, %v484
    %v587 = vpack.c.b16 %v487, %v485
    %v588 = vpack.c.b16 %v490, %v488
    %v589 = vpack.c.b16 %v491, %v489
    %vm688 = vcmask 130048
    %v690 = vsel %vm688, %v93, 0
    %692 = vmatpush.bf16.msra.mxu0 %v506
    %693 = vmatpush.bf16.msra.mxu0 %v504
    %694 = vmatpush.bf16.msra.mxu0 %v502
    %695 = vmatpush.bf16.msra.mxu0 %v500
    %696 = vmatpush.bf16.msra.mxu0 %v498
    %697 = vmatpush.bf16.msra.mxu0 %v496
    %698 = vmatpush.bf16.msra.mxu0 %v494
    %699 = vmatpush.bf16.msra.mxu0 %v492
    %700 = vmatmul.bf16.gmra.mxu0 %v87
    %v701 = vpop.f32.mrf.mxu0
    %v702 = vadd.f32 %v194, %v701
    %v703 = vpop.f32.mrf.mxu0
    %704 = vdwg.mxu0
    %705 = vmatpush.bf16.msra.mxu0 %v522
    %706 = vmatpush.bf16.msra.mxu0 %v520
    %707 = vmatpush.bf16.msra.mxu0 %v518
    %708 = vmatpush.bf16.msra.mxu0 %v516
    %709 = vmatpush.bf16.msra.mxu0 %v514
    %710 = vmatpush.bf16.msra.mxu0 %v512
    %711 = vmatpush.bf16.msra.mxu0 %v510
    %712 = vmatpush.bf16.msra.mxu0 %v508
    %713 = vmatmul.bf16.gmra.mxu0 %v88
    %v714 = vpop.f32.mrf.mxu0
    %v715 = vadd.f32 %v702, %v714
    %v716 = vpop.f32.mrf.mxu0
    %717 = vdwg.mxu0
    %718 = vmatpush.bf16.msra.mxu0 %v538
    %719 = vmatpush.bf16.msra.mxu0 %v536
    %720 = vmatpush.bf16.msra.mxu0 %v534
    %721 = vmatpush.bf16.msra.mxu0 %v532
    %722 = vmatpush.bf16.msra.mxu0 %v530
    %723 = vmatpush.bf16.msra.mxu0 %v528
    %724 = vmatpush.bf16.msra.mxu0 %v526
    %725 = vmatpush.bf16.msra.mxu0 %v524
    %726 = vmatmul.bf16.gmra.mxu0 %v89
    %v727 = vpop.f32.mrf.mxu0
    %v728 = vadd.f32 %v715, %v727
    %v729 = vpop.f32.mrf.mxu0
    %730 = vdwg.mxu0
    %731 = vmatpush.bf16.msra.mxu0 %v554
    %732 = vmatpush.bf16.msra.mxu0 %v552
    %733 = vmatpush.bf16.msra.mxu0 %v550
    %734 = vmatpush.bf16.msra.mxu0 %v548
    %735 = vmatpush.bf16.msra.mxu0 %v546
    %736 = vmatpush.bf16.msra.mxu0 %v544
    %737 = vmatpush.bf16.msra.mxu0 %v542
    %738 = vmatpush.bf16.msra.mxu0 %v540
    %739 = vmatmul.bf16.gmra.mxu0 %v90
    %v740 = vpop.f32.mrf.mxu0
    %v741 = vadd.f32 %v728, %v740
    %v742 = vpop.f32.mrf.mxu0
    %743 = vdwg.mxu0
    %744 = vmatpush.bf16.msra.mxu0 %v570
    %745 = vmatpush.bf16.msra.mxu0 %v568
    %746 = vmatpush.bf16.msra.mxu0 %v566
    %747 = vmatpush.bf16.msra.mxu0 %v564
    %748 = vmatpush.bf16.msra.mxu0 %v562
    %749 = vmatpush.bf16.msra.mxu0 %v560
    %750 = vmatpush.bf16.msra.mxu0 %v558
    %751 = vmatpush.bf16.msra.mxu0 %v556
    %752 = vmatmul.bf16.gmra.mxu0 %v91
    %v753 = vpop.f32.mrf.mxu0
    %v754 = vadd.f32 %v741, %v753
    %v755 = vpop.f32.mrf.mxu0
    %756 = vdwg.mxu0
    %757 = vmatpush.bf16.msra.mxu0 %v586
    %758 = vmatpush.bf16.msra.mxu0 %v584
    %759 = vmatpush.bf16.msra.mxu0 %v582
    %760 = vmatpush.bf16.msra.mxu0 %v580
    %761 = vmatpush.bf16.msra.mxu0 %v578
    %762 = vmatpush.bf16.msra.mxu0 %v576
    %763 = vmatpush.bf16.msra.mxu0 %v574
    %764 = vmatpush.bf16.msra.mxu0 %v572
    %765 = vmatmul.bf16.gmra.mxu0 %v92
    %v766 = vpop.f32.mrf.mxu0
    %v767 = vadd.f32 %v754, %v766
    %v768 = vpop.f32.mrf.mxu0
    %769 = vdwg.mxu0
    %770 = vmatpush.bf16.msra.mxu0 0
    %771 = vmatpush.bf16.msra.mxu0 0
    %772 = vmatpush.bf16.msra.mxu0 0
    %773 = vmatpush.bf16.msra.mxu0 0
    %774 = vmatpush.bf16.msra.mxu0 0
    %775 = vmatpush.bf16.msra.mxu0 0
    %776 = vmatpush.bf16.msra.mxu0 0
    %777 = vmatpush.bf16.msra.mxu0 %v588
    %778 = vmatmul.bf16.gmra.mxu0 %v690
    %v779 = vpop.f32.mrf.mxu0
    %v780 = vadd.f32 %v767, %v779
    %v781 = vpop.f32.mrf.mxu0
    %782 = vdwg.mxu0
    %783 = vmatpush.bf16.msra.mxu0 %v507
    %784 = vmatpush.bf16.msra.mxu0 %v505
    %785 = vmatpush.bf16.msra.mxu0 %v503
    %786 = vmatpush.bf16.msra.mxu0 %v501
    %787 = vmatpush.bf16.msra.mxu0 %v499
    %788 = vmatpush.bf16.msra.mxu0 %v497
    %789 = vmatpush.bf16.msra.mxu0 %v495
    %790 = vmatpush.bf16.msra.mxu0 %v493
    %791 = vmatmul.bf16.gmra.mxu0 %v87
    %v792 = vpop.f32.mrf.mxu0
    %v793 = vadd.f32 %v195, %v792
    %v794 = vpop.f32.mrf.mxu0
    %795 = vdwg.mxu0
    %796 = vmatpush.bf16.msra.mxu0 %v523
    %797 = vmatpush.bf16.msra.mxu0 %v521
    %798 = vmatpush.bf16.msra.mxu0 %v519
    %799 = vmatpush.bf16.msra.mxu0 %v517
    %800 = vmatpush.bf16.msra.mxu0 %v515
    %801 = vmatpush.bf16.msra.mxu0 %v513
    %802 = vmatpush.bf16.msra.mxu0 %v511
    %803 = vmatpush.bf16.msra.mxu0 %v509
    %804 = vmatmul.bf16.gmra.mxu0 %v88
    %v805 = vpop.f32.mrf.mxu0
    %v806 = vadd.f32 %v793, %v805
    %v807 = vpop.f32.mrf.mxu0
    %808 = vdwg.mxu0
    %809 = vmatpush.bf16.msra.mxu0 %v539
    %810 = vmatpush.bf16.msra.mxu0 %v537
    %811 = vmatpush.bf16.msra.mxu0 %v535
    %812 = vmatpush.bf16.msra.mxu0 %v533
    %813 = vmatpush.bf16.msra.mxu0 %v531
    %814 = vmatpush.bf16.msra.mxu0 %v529
    %815 = vmatpush.bf16.msra.mxu0 %v527
    %816 = vmatpush.bf16.msra.mxu0 %v525
    %817 = vmatmul.bf16.gmra.mxu0 %v89
    %v818 = vpop.f32.mrf.mxu0
    %v819 = vadd.f32 %v806, %v818
    %v820 = vpop.f32.mrf.mxu0
    %821 = vdwg.mxu0
    %822 = vmatpush.bf16.msra.mxu0 %v555
    %823 = vmatpush.bf16.msra.mxu0 %v553
    %824 = vmatpush.bf16.msra.mxu0 %v551
    %825 = vmatpush.bf16.msra.mxu0 %v549
    %826 = vmatpush.bf16.msra.mxu0 %v547
    %827 = vmatpush.bf16.msra.mxu0 %v545
    %828 = vmatpush.bf16.msra.mxu0 %v543
    %829 = vmatpush.bf16.msra.mxu0 %v541
    %830 = vmatmul.bf16.gmra.mxu0 %v90
    %v831 = vpop.f32.mrf.mxu0
    %v832 = vadd.f32 %v819, %v831
    %v833 = vpop.f32.mrf.mxu0
    %834 = vdwg.mxu0
    %835 = vmatpush.bf16.msra.mxu0 %v571
    %836 = vmatpush.bf16.msra.mxu0 %v569
    %837 = vmatpush.bf16.msra.mxu0 %v567
    %838 = vmatpush.bf16.msra.mxu0 %v565
    %839 = vmatpush.bf16.msra.mxu0 %v563
    %840 = vmatpush.bf16.msra.mxu0 %v561
    %841 = vmatpush.bf16.msra.mxu0 %v559
    %842 = vmatpush.bf16.msra.mxu0 %v557
    %843 = vmatmul.bf16.gmra.mxu0 %v91
    %v844 = vpop.f32.mrf.mxu0
    %v845 = vadd.f32 %v832, %v844
    %v846 = vpop.f32.mrf.mxu0
    %847 = vdwg.mxu0
    %848 = vmatpush.bf16.msra.mxu0 %v587
    %849 = vmatpush.bf16.msra.mxu0 %v585
    %850 = vmatpush.bf16.msra.mxu0 %v583
    %851 = vmatpush.bf16.msra.mxu0 %v581
    %852 = vmatpush.bf16.msra.mxu0 %v579
    %853 = vmatpush.bf16.msra.mxu0 %v577
    %854 = vmatpush.bf16.msra.mxu0 %v575
    %855 = vmatpush.bf16.msra.mxu0 %v573
    %856 = vmatmul.bf16.gmra.mxu0 %v92
    %v857 = vpop.f32.mrf.mxu0
    %v858 = vadd.f32 %v845, %v857
    %v859 = vpop.f32.mrf.mxu0
    %860 = vdwg.mxu0
    %861 = vmatpush.bf16.msra.mxu0 0
    %862 = vmatpush.bf16.msra.mxu0 0
    %863 = vmatpush.bf16.msra.mxu0 0
    %864 = vmatpush.bf16.msra.mxu0 0
    %865 = vmatpush.bf16.msra.mxu0 0
    %866 = vmatpush.bf16.msra.mxu0 0
    %867 = vmatpush.bf16.msra.mxu0 0
    %868 = vmatpush.bf16.msra.mxu0 %v589
    %869 = vmatmul.bf16.gmra.mxu0 %v690
    %v870 = vpop.f32.mrf.mxu0
    %v871 = vadd.f32 %v858, %v870
    %v872 = vpop.f32.mrf.mxu0
    %873 = vdwg.mxu0
    %v874 = vmax.f32 %v780, 0.0
    %v875 = vmax.f32 %v871, 0.0
    %v876 = vpack.c.bf16 %v874, %v874
    %v877 = vpack.c.bf16 %v875, %v875
    %v878 = vld [vmem:[#allocation2] sm:$0xf]
    %v879 = vld [vmem:[#allocation2 + $0x4] sm:$0xf]
    %v880 = vld [vmem:[#allocation2 + $0x8] sm:$0xf]
    %v881 = vld [vmem:[#allocation2 + $0xc] sm:$0xf]
    %v882 = vld [vmem:[#allocation2 + $0x10] sm:$0xf]
    %v883 = vld [vmem:[#allocation2 + $0x14] sm:$0xf]
    %v884 = vld [vmem:[#allocation2 + $0x18] sm:$0xf]
    %v885 = vld [vmem:[#allocation2 + $0x1c] sm:$0xf]
    %v886 = vld [vmem:[#allocation2 + $0x20] sm:$0xf]
    %v887 = vld [vmem:[#allocation2 + $0x24] sm:$0xf]
    %v888 = vld [vmem:[#allocation2 + $0x28] sm:$0xf]
    %v889 = vld [vmem:[#allocation2 + $0x2c] sm:$0xf]
    %v890 = vld [vmem:[#allocation2 + $0x30] sm:$0xf]
    %v891 = vld [vmem:[#allocation2 + $0x34] sm:$0xf]
    %v892 = vld [vmem:[#allocation2 + $0x38] sm:$0xf]
    %v893 = vld [vmem:[#allocation2 + $0x3c] sm:$0xf]
    %v894 = vld [vmem:[#allocation2 + $0x40] sm:$0xf]
    %v895 = vld [vmem:[#allocation2 + $0x44] sm:$0xf]
    %v896 = vld [vmem:[#allocation2 + $0x48] sm:$0xf]
    %v897 = vld [vmem:[#allocation2 + $0x4c] sm:$0xf]
    %v898 = vld [vmem:[#allocation2 + $0x50] sm:$0xf]
    %v899 = vld [vmem:[#allocation2 + $0x54] sm:$0xf]
    %v900 = vld [vmem:[#allocation2 + $0x58] sm:$0xf]
    %v901 = vld [vmem:[#allocation2 + $0x5c] sm:$0xf]
    %v902 = vld [vmem:[#allocation2 + $0x60] sm:$0xf]
    %v903 = vld [vmem:[#allocation2 + $0x64] sm:$0xf]
    %v904 = vld [vmem:[#allocation2 + $0x68] sm:$0xf]
    %v905 = vld [vmem:[#allocation2 + $0x6c] sm:$0xf]
    %v906 = vld [vmem:[#allocation2 + $0x70] sm:$0xf]
    %v907 = vld [vmem:[#allocation2 + $0x74] sm:$0xf]
    %v908 = vld [vmem:[#allocation2 + $0x78] sm:$0xf]
    %v909 = vld [vmem:[#allocation2 + $0x7c] sm:$0xf]
    %v910 = vld [vmem:[%s4] sm:$0x1]
    %v912 = vperm.slane %v910, 0
    %v946 = vunpack.c.l.b16 %v878
    %v947 = vunpack.c.l.b16 %v879
    %v948 = vunpack.c.l.b16 %v880
    %v949 = vunpack.c.l.b16 %v881
    %v950 = vunpack.c.l.b16 %v882
    %v951 = vunpack.c.l.b16 %v883
    %v952 = vunpack.c.l.b16 %v884
    %v953 = vunpack.c.l.b16 %v885
    %v954 = vunpack.c.l.b16 %v886
    %v955 = vunpack.c.l.b16 %v887
    %v956 = vunpack.c.l.b16 %v888
    %v957 = vunpack.c.l.b16 %v889
    %v958 = vunpack.c.l.b16 %v890
    %v959 = vunpack.c.l.b16 %v891
    %v960 = vunpack.c.l.b16 %v892
    %v961 = vunpack.c.l.b16 %v893
    %v962 = vunpack.c.l.b16 %v894
    %v963 = vunpack.c.l.b16 %v895
    %v964 = vunpack.c.l.b16 %v896
    %v965 = vunpack.c.l.b16 %v897
    %v966 = vunpack.c.l.b16 %v898
    %v967 = vunpack.c.l.b16 %v899
    %v968 = vunpack.c.l.b16 %v900
    %v969 = vunpack.c.l.b16 %v901
    %v970 = vunpack.c.l.b16 %v902
    %v971 = vunpack.c.l.b16 %v903
    %v972 = vunpack.c.l.b16 %v904
    %v973 = vunpack.c.l.b16 %v905
    %v974 = vunpack.c.l.b16 %v906
    %v975 = vunpack.c.l.b16 %v907
    %v976 = vunpack.c.l.b16 %v908
    %v977 = vunpack.c.l.b16 %v909
    %v978 = vpack.c.b16 %v947, %v946
    %v979 = vpack.c.b16 %v949, %v948
    %v980 = vpack.c.b16 %v951, %v950
    %v981 = vpack.c.b16 %v953, %v952
    %v982 = vpack.c.b16 %v955, %v954
    %v983 = vpack.c.b16 %v957, %v956
    %v984 = vpack.c.b16 %v959, %v958
    %v985 = vpack.c.b16 %v961, %v960
    %v986 = vpack.c.b16 %v963, %v962
    %v987 = vpack.c.b16 %v965, %v964
    %v988 = vpack.c.b16 %v967, %v966
    %v989 = vpack.c.b16 %v969, %v968
    %v990 = vpack.c.b16 %v971, %v970
    %v991 = vpack.c.b16 %v973, %v972
    %v992 = vpack.c.b16 %v975, %v974
    %v993 = vpack.c.b16 %v977, %v976
    %1010 = vmatpush.bf16.msra.mxu0 %v985
    %1011 = vmatpush.bf16.msra.mxu0 %v984
    %1012 = vmatpush.bf16.msra.mxu0 %v983
    %1013 = vmatpush.bf16.msra.mxu0 %v982
    %1014 = vmatpush.bf16.msra.mxu0 %v981
    %1015 = vmatpush.bf16.msra.mxu0 %v980
    %1016 = vmatpush.bf16.msra.mxu0 %v979
    %1017 = vmatpush.bf16.msra.mxu0 %v978
    %1018 = vmatmul.bf16.gmra.mxu0 %v876
    %v1019 = vpop.f32.mrf.mxu0
    %v1020 = vadd.f32 %v912, %v1019
    %v1021 = vpop.f32.mrf.mxu0
    %1022 = vdwg.mxu0
    %1023 = vmatpush.bf16.msra.mxu0 %v993
    %1024 = vmatpush.bf16.msra.mxu0 %v992
    %1025 = vmatpush.bf16.msra.mxu0 %v991
    %1026 = vmatpush.bf16.msra.mxu0 %v990
    %1027 = vmatpush.bf16.msra.mxu0 %v989
    %1028 = vmatpush.bf16.msra.mxu0 %v988
    %1029 = vmatpush.bf16.msra.mxu0 %v987
    %1030 = vmatpush.bf16.msra.mxu0 %v986
    %1031 = vmatmul.bf16.gmra.mxu0 %v877
    %v1032 = vpop.f32.mrf.mxu0
    %v1033 = vadd.f32 %v1020, %v1032
    %v1034 = vpop.f32.mrf.mxu0
    %1035 = vdwg.mxu0
    %v1036 = vmax.f32 %v1033, 0.0
    %v1037 = vpack.c.bf16 %v1036, %v1036
    %v1038 = vld [vmem:[#allocation4] sm:$0xf]
    %v1039 = vld [vmem:[#allocation4 + $0x4] sm:$0xf]
    %v1040 = vld [vmem:[#allocation4 + $0x8] sm:$0xf]
    %v1041 = vld [vmem:[#allocation4 + $0xc] sm:$0xf]
    %v1042 = vld [vmem:[#allocation4 + $0x10] sm:$0xf]
    %v1043 = vld [vmem:[#allocation4 + $0x14] sm:$0xf]
    %v1044 = vld [vmem:[#allocation4 + $0x18] sm:$0xf]
    %v1045 = vld [vmem:[#allocation4 + $0x1c] sm:$0xf]
    %v1046 = vld [vmem:[#allocation4 + $0x20] sm:$0xf]
    %v1047 = vld [vmem:[#allocation4 + $0x24] sm:$0xf]
    %v1048 = vld [vmem:[#allocation4 + $0x28] sm:$0xf]
    %v1049 = vld [vmem:[#allocation4 + $0x2c] sm:$0xf]
    %v1050 = vld [vmem:[#allocation4 + $0x30] sm:$0xf]
    %v1051 = vld [vmem:[#allocation4 + $0x34] sm:$0xf]
    %v1052 = vld [vmem:[#allocation4 + $0x38] sm:$0xf]
    %v1053 = vld [vmem:[#allocation4 + $0x3c] sm:$0xf]
    %v1054 = vld [vmem:[%s6] sm:$0x1]
    %v1056 = vperm.slane %v1054, 0
    %v1074 = vunpack.c.l.b16 %v1038
    %v1075 = vunpack.c.l.b16 %v1039
    %v1076 = vunpack.c.l.b16 %v1040
    %v1077 = vunpack.c.l.b16 %v1041
    %v1078 = vunpack.c.l.b16 %v1042
    %v1079 = vunpack.c.l.b16 %v1043
    %v1080 = vunpack.c.l.b16 %v1044
    %v1081 = vunpack.c.l.b16 %v1045
    %v1082 = vunpack.c.l.b16 %v1046
    %v1083 = vunpack.c.l.b16 %v1047
    %v1084 = vunpack.c.l.b16 %v1048
    %v1085 = vunpack.c.l.b16 %v1049
    %v1086 = vunpack.c.l.b16 %v1050
    %v1087 = vunpack.c.l.b16 %v1051
    %v1088 = vunpack.c.l.b16 %v1052
    %v1089 = vunpack.c.l.b16 %v1053
    %v1090 = vpack.c.b16 %v1075, %v1074
    %v1091 = vpack.c.b16 %v1077, %v1076
    %v1092 = vpack.c.b16 %v1079, %v1078
    %v1093 = vpack.c.b16 %v1081, %v1080
    %v1094 = vpack.c.b16 %v1083, %v1082
    %v1095 = vpack.c.b16 %v1085, %v1084
    %v1096 = vpack.c.b16 %v1087, %v1086
    %v1097 = vpack.c.b16 %v1089, %v1088
    %1106 = vmatpush.bf16.msra.mxu0 %v1097
    %1107 = vmatpush.bf16.msra.mxu0 %v1096
    %1108 = vmatpush.bf16.msra.mxu0 %v1095
    %1109 = vmatpush.bf16.msra.mxu0 %v1094
    %1110 = vmatpush.bf16.msra.mxu0 %v1093
    %1111 = vmatpush.bf16.msra.mxu0 %v1092
    %1112 = vmatpush.bf16.msra.mxu0 %v1091
    %1113 = vmatpush.bf16.msra.mxu0 %v1090
    %1114 = vmatmul.bf16.gmra.mxu0 %v1037
    %v1115 = vpop.f32.mrf.mxu0
    %v1116 = vadd.f32 %v1056, %v1115
    %v1117 = vpop.f32.mrf.mxu0
    %1118 = vdwg.mxu0
    %v1119 = vmax.f32 %v1116, 0.0
    %v1120 = vpack.c.bf16 %v1119, %v1119
    %v1121 = vld [vmem:[#allocation6] sm:$0xf]
    %v1122 = vld [vmem:[#allocation6 + $0x4] sm:$0xf]
    %v1123 = vld [vmem:[#allocation6 + $0x8] sm:$0xf]
    %v1124 = vld [vmem:[#allocation6 + $0xc] sm:$0xf]
    %v1125 = vld [vmem:[#allocation6 + $0x10] sm:$0xf]
    %v1126 = vld [vmem:[#allocation6 + $0x14] sm:$0xf]
    %v1127 = vld [vmem:[#allocation6 + $0x18] sm:$0xf]
    %v1128 = vld [vmem:[#allocation6 + $0x1c] sm:$0xf]
    %v1129 = vld [vmem:[#allocation6 + $0x20] sm:$0xf]
    %v1130 = vld [vmem:[#allocation6 + $0x24] sm:$0xf]
    %v1131 = vld [vmem:[#allocation6 + $0x28] sm:$0xf]
    %v1132 = vld [vmem:[#allocation6 + $0x2c] sm:$0xf]
    %v1133 = vld [vmem:[#allocation6 + $0x30] sm:$0xf]
    %v1134 = vld [vmem:[#allocation6 + $0x34] sm:$0xf]
    %v1135 = vld [vmem:[#allocation6 + $0x38] sm:$0xf]
    %v1136 = vld [vmem:[#allocation6 + $0x3c] sm:$0xf]
    %v1137 = vld [vmem:[%s8] sm:$0x1]
    %v1139 = vperm.slane %v1137, 0
    %v1157 = vunpack.c.l.b16 %v1121
    %v1158 = vunpack.c.l.b16 %v1122
    %v1159 = vunpack.c.l.b16 %v1123
    %v1160 = vunpack.c.l.b16 %v1124
    %v1161 = vunpack.c.l.b16 %v1125
    %v1162 = vunpack.c.l.b16 %v1126
    %v1163 = vunpack.c.l.b16 %v1127
    %v1164 = vunpack.c.l.b16 %v1128
    %v1165 = vunpack.c.l.b16 %v1129
    %v1166 = vunpack.c.l.b16 %v1130
    %v1167 = vunpack.c.l.b16 %v1131
    %v1168 = vunpack.c.l.b16 %v1132
    %v1169 = vunpack.c.l.b16 %v1133
    %v1170 = vunpack.c.l.b16 %v1134
    %v1171 = vunpack.c.l.b16 %v1135
    %v1172 = vunpack.c.l.b16 %v1136
    %v1173 = vpack.c.b16 %v1158, %v1157
    %v1174 = vpack.c.b16 %v1160, %v1159
    %v1175 = vpack.c.b16 %v1162, %v1161
    %v1176 = vpack.c.b16 %v1164, %v1163
    %v1177 = vpack.c.b16 %v1166, %v1165
    %v1178 = vpack.c.b16 %v1168, %v1167
    %v1179 = vpack.c.b16 %v1170, %v1169
    %v1180 = vpack.c.b16 %v1172, %v1171
    %1189 = vmatpush.bf16.msra.mxu0 %v1180
    %1190 = vmatpush.bf16.msra.mxu0 %v1179
    %1191 = vmatpush.bf16.msra.mxu0 %v1178
    %1192 = vmatpush.bf16.msra.mxu0 %v1177
    %1193 = vmatpush.bf16.msra.mxu0 %v1176
    %1194 = vmatpush.bf16.msra.mxu0 %v1175
    %1195 = vmatpush.bf16.msra.mxu0 %v1174
    %1196 = vmatpush.bf16.msra.mxu0 %v1173
    %1197 = vmatmul.bf16.gmra.mxu0 %v1120
    %v1198 = vpop.f32.mrf.mxu0
    %v1199 = vadd.f32 %v1139, %v1198
    %v1200 = vpop.f32.mrf.mxu0
    %1201 = vdwg.mxu0
    %1202 = vmax.xlane.f32.xlu0 %v1199
    %v1203 = vpop.xlane.xlu0 %1202
    %v1204 = vsub.f32 %v1199, %v1203
    %v1205 = vmul.f32 %v1204, 1.442695
    %v1206 = vpow.pop %v1205
    %1207 = vadd.xlane.f32.xlu0 %v1206
    %v1208 = vpop.xlane.xlu0 %1207
    %v1209 = vlog2.pop %v1208
    %v1210 = vmul.f32 %v1209, 0.6931472
    %v1211 = vsub.f32 %v1204, %v1210
    %v1212 = vpack.c.bf16 %v1211, %v1211
    %1213 = vst [vmem:[%s9] sm:$0xf] %v1212
    // Predicated region
    $region50: #{classifier_forward.1} parent=1 // pred_check
      _
    $region51: #{classifier_forward.1} parent=1 // pred_check_branch
      %1215 = sbr.rel (0) target = $region53
    $region52: #{classifier_forward.1} parent=1 // pred_region
      _
    $region53: #{classifier_forward.1} parent=1 // pred_fallthru
      _
    // Predicated region
    $region54: #{classifier_forward.1} parent=1 // pred_check
      _
    $region55: #{classifier_forward.1} parent=1 // pred_check_branch
      %1217 = sbr.rel (0) target = $region57
    $region56: #{classifier_forward.1} parent=1 // pred_region
      _
    $region57: #{classifier_forward.1} parent=1 // pred_fallthru
      _
    %1218 = vsyncpa [#allocation3], 1
    %1219 = vsyncpa [#allocation5], 1

</llo_original>
